<compile_context>
chip_gen: v7x
topology: tpu7x:2x2x1
jax: 0.10.0
libtpu: 0.0.40
codegen_flags: <defaults>
</compile_context>

<pallas_src>
import jax
import jax.numpy as jnp
from jax.experimental import pallas as pl
from jax.experimental.pallas import tpu as pltpu


def _awl_kernel(p_ref, l_ref, out_ref):
    # p_ref, l_ref: (1, num) f32 in VMEM; out_ref: (1, 1) f32 in SMEM.
    p = p_ref[...]                              # single unmasked tile load
    l = l_ref[...]
    p2 = p * p
    inv_p2 = pl.reciprocal(p2, approx=False)    # exact reciprocal (VALU path)
    terms = (0.5 * inv_p2) * l + jnp.log1p(p2)  # log1p: better for small p
    out_ref[0, 0] = jnp.sum(terms)              # XLU reduce -> scalar to SMEM


def automatic_weighted_loss(params, losses):
    """params: (num,) f32 weights; losses: (num,) f32 (one scalar loss per weight).

    Returns a (1, 1) f32 array; squeeze at the consumer (keeps the wrapper
    free of extra tiny XLA ops around the custom call).
    """
    num = params.shape[0]
    assert losses.shape == (num,), "need one loss per weight"

    p2d = params.astype(jnp.float32).reshape(1, num)   # metadata-only reshape
    l2d = losses.astype(jnp.float32).reshape(1, num)

    # Each (1, num) f32 input pads to one (8, 128) tile = 4096 B in VMEM.
    padded_tile_bytes = 8 * 128 * 4

    out = pl.pallas_call(
        _awl_kernel,
        out_shape=jax.ShapeDtypeStruct((1, 1), jnp.float32),
        in_specs=[
            pl.BlockSpec(memory_space=pltpu.VMEM),
            pl.BlockSpec(memory_space=pltpu.VMEM),
        ],
        out_specs=pl.BlockSpec(memory_space=pltpu.SMEM),
        cost_estimate=pl.CostEstimate(
            flops=6 * num,                       # square, recip, 2 muls, add, reduce
            transcendentals=1 * num,             # log1p per task
            bytes_accessed=2 * padded_tile_bytes + 4,
        ),
    )(p2d, l2d)
    return out  # (1, 1)


if __name__ == "__main__":
    num = 2
    # Deterministic parameter init, matching torch.ones(num) in __init__.
    params = jnp.ones((num,), dtype=jnp.float32)

    # Deterministic example scalar losses, built as one (num,) array.
    key = jax.random.PRNGKey(0)
    losses = jnp.abs(jax.random.normal(key, (num,), dtype=jnp.float32)) + 0.1

    result = automatic_weighted_loss(params, losses)
    result = jax.block_until_ready(result)
    result_scalar = result[0, 0]

    # Pure-JAX reference check (log1p(p^2) == log(1 + p^2)).
    p2 = params ** 2
    ref = jnp.sum(0.5 / p2 * losses + jnp.log1p(p2))
    assert jnp.allclose(result_scalar, ref, rtol=1e-6, atol=1e-6), (result_scalar, ref)

    print("KERNEL_OK")
</pallas_src>

<mosaic_0001>
module attributes {stable_mosaic.version = 11 : i64} {
  func.func @_awl_kernel(%arg0: memref<1x2xf32, #tpu.memory_space<vmem>>, %arg1: memref<1x2xf32, #tpu.memory_space<vmem>>, %arg2: memref<1x1xf32, #tpu.memory_space<smem>>) attributes {dimension_semantics = [], scalar_prefetch = 0 : i64, scratch_operands = 0 : i64, tpu.core_type = #tpu.core_type<tc>} {
    %c0 = arith.constant 0 : index
    %c0_0 = arith.constant 0 : index
    %0 = vector.load %arg0[%c0, %c0_0] : memref<1x2xf32, #tpu.memory_space<vmem>>, vector<1x2xf32>
    %c0_1 = arith.constant 0 : index
    %c0_2 = arith.constant 0 : index
    %1 = vector.load %arg1[%c0_1, %c0_2] : memref<1x2xf32, #tpu.memory_space<vmem>>, vector<1x2xf32>
    %2 = arith.mulf %0, %0 : vector<1x2xf32>
    %3 = tpu.reciprocal %2 : vector<1x2xf32> -> vector<1x2xf32>
    %cst = arith.constant 5.000000e-01 : f32
    %4 = vector.broadcast %cst : f32 to vector<1x2xf32>
    %5 = arith.mulf %4, %3 : vector<1x2xf32>
    %6 = arith.mulf %5, %1 : vector<1x2xf32>
    %7 = math.log1p %2 : vector<1x2xf32>
    %8 = arith.addf %6, %7 : vector<1x2xf32>
    %9 = vector.shape_cast %8 : vector<1x2xf32> to vector<1x1x2xf32>
    %cst_3 = arith.constant dense<0.000000e+00> : vector<1xf32>
    %10 = vector.multi_reduction <add>, %9, %cst_3 [1, 2] : vector<1x1x2xf32> to vector<1xf32>
    %11 = vector.shape_cast %10 : vector<1xf32> to vector<1x1x1xf32>
    %12 = vector.extract %11[0, 0, 0] : f32 from vector<1x1x1xf32>
    %c0_4 = arith.constant 0 : index
    %c0_5 = arith.constant 0 : index
    %13 = memref.load %arg2[%c0_4, %c0_5] : memref<1x1xf32, #tpu.memory_space<smem>>
    memref.store %12, %arg2[%c0_4, %c0_5] : memref<1x1xf32, #tpu.memory_space<smem>>
    return
  }
}

</mosaic_0001>

<llo_original>
// kernel: tpu_custom_call.1
$region0: #{tpu_custom_call.1}
  #allocation0 [shape = 'u32[]', space=smem, size = 0x4, offset = 0x4, fixed_abs, tag = 'smem constant byte address 0x4 - core index']
  #allocation1 [shape = 'u32[144,128]{1,0:T(1,128)}', space=vmem, size = 0x12000, scoped, tag = 'internal scratch']
  %s0 = inlined_call_operand.hbm [shape: f32[1,2], index: 0, kind: input, shape index: {}]
  %s1 = inlined_call_operand.vmem [shape: f32[1,2], index: 1, kind: input, shape index: {}]
  %s2 = inlined_call_operand.hbm [shape: f32[1,1], index: 2, kind: output, shape index: {}]
  %s3 = sld [smem:[#allocation0]]
  $region22: #{tpu_custom_call.1} parent=0
    _
  %s5 = ssub.s32 1, %s3
  %s6 = scalar_select 0, %s5, %s3
  $region1: #{tpu_custom_call.1} parent=0
    #allocation2 [shape = 'u8[512]{0}', space=vmem, size = 0x400, scoped, tag = 'input window, operand 0, single buffered']
    #allocation3 [shape = 's32[1]{0}', space=sflag, size = 0x4, scoped, tag = 'scoped memory for tpu_custom_call.1']
    #allocation4 [shape = 's32[1]{0}', space=sflag, size = 0x4, scoped, tag = 'scoped memory for tpu_custom_call.1']
    #allocation5 [shape = 'u8[512]{0}', space=smem, size = 0x200, scoped, tag = 'output window, operand 0, single buffered']
    %7 = vsyncpa [#allocation3], 0
    %8 = vsyncpa [#allocation4], 0
    // Predicated region
    $region2: #{tpu_custom_call.1} parent=1 // pred_check
      _
    $region3: #{tpu_custom_call.1} parent=1 // pred_check_branch
      %10 = sbr.rel (0) target = $region5
    $region4: #{tpu_custom_call.1} parent=1 // pred_region
      %s12 = ssub.s32 16, 16
      %13 = vsyncadd [#allocation3], %s12
      %s15 = sshll.u32 [#allocation2], 4
      %s16 = int_to_ptr.vmem [resolvable:$true] %s15
      %18 = dma.hbm_to_vmem [thread:$0]  %s0, 16, %s16, [#allocation3]
    $region5: #{tpu_custom_call.1} parent=1 // pred_fallthru
      _
    // Predicated region
    $region6: #{tpu_custom_call.1} parent=1 // pred_check
      _
    $region7: #{tpu_custom_call.1} parent=1 // pred_check_branch
      %20 = sbr.rel (0) target = $region9
    $region8: #{tpu_custom_call.1} parent=1 // pred_region
      _
    $region9: #{tpu_custom_call.1} parent=1 // pred_fallthru
      _
    // Predicated region
    $region10: #{tpu_custom_call.1} parent=1 // pred_check
      _
    $region11: #{tpu_custom_call.1} parent=1 // pred_check_branch
      %22 = sbr.rel (0) target = $region13
    $region12: #{tpu_custom_call.1} parent=1 // pred_region
      %23 = dma.done [#allocation3], 16
    $region13: #{tpu_custom_call.1} parent=1 // pred_fallthru
      _
    %v24 = vld [vmem:[#allocation2] sm:$0x1]
    %v25 = vld [vmem:[%s1] sm:$0x1]
    %v26 = vmul.f32 %v24, %v24
    %v27 = vrcp.pop %v26
    %v28 = vmul.f32 %v27, 0.5
    %v29 = vmul.f32 %v28, %v25
    %v30 = vadd.f32 %v26, 1.0
    %v31 = vlog2.pop %v30
    %v32 = vmul.f32 %v31, 0.6931472
    %v33 = vmul.f32 -0.5, %v26
    %v34 = vadd.f32 %v33, 1.0
    %v35 = vmul.f32 %v34, %v26
    %v36 = vand.u32 2147483647, %v26
    %vm37 = vcmp.lt.f32.partialorder %v36, 0.0004427343
    %v38 = vsel %vm37, %v35, %v32
    %v39 = vadd.f32 %v29, %v38
    %vm40 = vcmask 8192
    %v41 = vsel %vm40, %v39, 0.0
    %42 = vadd.xlane.f32.xlu0 %v41
    %v43 = vpop.xlane.xlu0 %42
    %v44 = vrot.slane %v43, 4
    %v45 = vadd.f32 %v43, %v44
    %v46 = vrot.slane %v45, 2
    %v47 = vadd.f32 %v45, %v46
    %v48 = vrot.slane %v47, 1
    %v49 = vadd.f32 %v47, %v48
    %s50 = vtos %v49
    %s51 = scalar_lea.smem [#allocation5], 0
    %52 = sst [smem:[%s51]] %s50
    // Predicated region
    $region14: #{tpu_custom_call.1} parent=1 // pred_check
      _
    $region15: #{tpu_custom_call.1} parent=1 // pred_check_branch
      %54 = sbr.rel (0) target = $region17
    $region16: #{tpu_custom_call.1} parent=1 // pred_region
      %s56 = ssub.s32 16, 16
      %57 = vsyncadd [#allocation4], %s56
      %60 = dma.smem_to_hbm [#allocation5], 16, %s2, [#allocation4]
    $region17: #{tpu_custom_call.1} parent=1 // pred_fallthru
      _
    // Predicated region
    $region18: #{tpu_custom_call.1} parent=1 // pred_check
      _
    $region19: #{tpu_custom_call.1} parent=1 // pred_check_branch
      %62 = sbr.rel (0) target = $region21
    $region20: #{tpu_custom_call.1} parent=1 // pred_region
      %63 = dma.done [#allocation4], 16
    $region21: #{tpu_custom_call.1} parent=1 // pred_fallthru
      _
    %64 = sfence
    %65 = vsyncpa [#allocation3], 1
    %66 = vsyncpa [#allocation4], 1

</llo_original>
